<compile_context>
chip_gen: v6e
topology: v6e:2x2x1
jax: 0.10.0
libtpu: 0.0.40
codegen_flags: <defaults>
</compile_context>

<pallas_src>
import functools

import jax
import jax.numpy as jnp
from jax import lax
from jax.experimental import pallas as pl
from jax.experimental.pallas import tpu as pltpu


_CHUNK = 128          # lane width of each partial-sum slice
_UNROLL_LIMIT = 16    # fully unroll the chunk loop up to this many chunks


# ------------------------------ kernel helpers ------------------------------

def _lane_partial_sum(x_ref, l_len):
    """Sum x_ref[0, :, :l_len] into a (C, _CHUNK) f32 partial with VPU adds.

    Requires l_len % _CHUNK == 0 and l_len >= _CHUNK. Slices + casts one
    (C, 128) chunk at a time (small live vreg set); the expensive cross-lane
    (XLU) reduce is deferred to the caller.
    """
    n_full = l_len // _CHUNK
    first = x_ref[0, :, 0:_CHUNK].astype(jnp.float32)
    if n_full <= _UNROLL_LIMIT:
        partial = first
        for j in range(1, n_full):
            partial = partial + x_ref[0, :, j * _CHUNK:(j + 1) * _CHUNK].astype(jnp.float32)
        return partial

    def body(j, acc):
        start = pl.multiple_of(j * _CHUNK, _CHUNK)
        return acc + x_ref[0, :, pl.ds(start, _CHUNK)].astype(jnp.float32)

    return lax.fori_loop(1, n_full, body, first)


# ----------------------- fused single-pass (pool+MLP+scale) -----------------

def _fused_kernel(x_ref, w1_ref, b1_ref, w2_ref, b2_ref, o_ref, *, inv_l):
    # x_ref: (1, C, L) resident sample; w1: (Cr, C); b1: (Cr, 1);
    # w2: (C, Cr); b2: (C, 1); o_ref: (1, C, L).
    L = x_ref.shape[2]
    n_full = L // _CHUNK
    rem = L - n_full * _CHUNK

    total = None
    if n_full > 0:
        partial = _lane_partial_sum(x_ref, n_full * _CHUNK)          # (C, 128)
        total = jnp.sum(partial, axis=-1, keepdims=True)             # (C, 1)
    if rem > 0:
        rsum = jnp.sum(x_ref[0, :, n_full * _CHUNK:L].astype(jnp.float32),
                       axis=-1, keepdims=True)
        total = rsum if total is None else total + rsum

    pooled = total * inv_l                                           # (C, 1) f32
    h = jnp.dot(w1_ref[...], pooled, preferred_element_type=jnp.float32)
    h = jnp.maximum(h + b1_ref[...], 0.0)                            # (Cr, 1)
    g = jnp.dot(w2_ref[...], h, preferred_element_type=jnp.float32)
    g = jax.nn.sigmoid(g + b2_ref[...])                              # (C, 1)

    # Scale the already-resident tile and store lane-dense.
    o_ref[0] = (x_ref[0].astype(jnp.float32) * g).astype(o_ref.dtype)


# ----------------------- two-phase fallback: phase 1 pool --------------------

def _pool_kernel(x_ref, pooled_ref, acc_ref, *, inv_l):
    # x_ref: (1, C, l_tile); pooled_ref: (1, C, 1) f32; acc_ref: (C, 128) f32.
    l = pl.program_id(1)
    partial = _lane_partial_sum(x_ref, x_ref.shape[2])               # (C, 128)

    @pl.when(l == 0)
    def _():
        acc_ref[...] = partial          # init with first partial (no memset)

    @pl.when(l > 0)
    def _():
        acc_ref[...] = acc_ref[...] + partial

    @pl.when(l == pl.num_programs(1) - 1)
    def _():
        pooled_ref[0] = jnp.sum(acc_ref[...], axis=-1, keepdims=True) * inv_l


# ----------------------- two-phase fallback: phase 2 scale -------------------

def _scale_kernel(x_ref, gate_ref, o_ref):
    # x_ref: (1, C, l_tile); gate_ref: (1, C, 1) f32; o_ref: (1, C, l_tile).
    o_ref[...] = (x_ref[...].astype(jnp.float32) * gate_ref[...]).astype(o_ref.dtype)


# --------------------------------- wrapper -----------------------------------

def _vmem_capacity_bytes():
    try:
        info = pltpu.get_tpu_info()
        cap = getattr(info, "vmem_capacity_bytes", None)
        if cap:
            return int(cap)
    except Exception:
        pass
    return 64 * 1024 * 1024   # conservative default: v7x per-TensorCore VMEM


def _gen_budgets():
    """Returns (vmem_capacity, vmem_limit_cap, per_buffer_budget)."""
    cap = _vmem_capacity_bytes()
    if cap >= 100 * 1024 * 1024:
        # v5e / v6e: 128 MiB physical VMEM, lower HBM BW -> big tiles pay off.
        return cap, 100 * 1024 * 1024, 6 * 1024 * 1024
    # v7x: 64 MiB per TC -> leave headroom for compiler / internal scratch.
    return cap, 48 * 1024 * 1024, 3 * 1024 * 1024


def _pick_l_tile(Lp, C, itemsize, per_buffer_budget):
    """Largest multiple-of-128 tile dividing Lp within the per-buffer budget."""
    max_lanes = max(_CHUNK,
                    (per_buffer_budget // max(1, C * itemsize)) // _CHUNK * _CHUNK)
    best = _CHUNK
    for t in range(_CHUNK, min(Lp, max_lanes) + 1, _CHUNK):
        if Lp % t == 0:
            best = t
    return best


def se_block(x, w1, b1, w2, b2, *, fused=None, l_tile=None):
    """x: (N, C, L); w1: (C//r, C); b1: (C//r,); w2: (C, C//r); b2: (C,)."""
    N, C, L = x.shape
    Cr = w1.shape[0]
    assert w1.shape == (Cr, C) and w2.shape == (C, Cr)
    assert b1.shape == (Cr,) and b2.shape == (C,)

    itemsize = jnp.dtype(x.dtype).itemsize
    _, limit_cap, per_buffer = _gen_budgets()

    w1f = w1.astype(jnp.float32)
    w2f = w2.astype(jnp.float32)
    b1c = b1.reshape(Cr, 1).astype(jnp.float32)
    b2c = b2.reshape(C, 1).astype(jnp.float32)
    # Assume the constant-index weight blocks may be double-buffered (safe over-count).
    param_bytes = 2 * (Cr * C + C * Cr + Cr + C) * 4

    # ---------------- fused single-pass path (x[n] resident in VMEM) ----------
    sample_bytes = C * L * itemsize
    fused_need = 4 * sample_bytes + param_bytes + (2 << 20)   # in+out double buffers
    if fused is None:
        fused = fused_need <= limit_cap

    if fused:
        return pl.pallas_call(
            functools.partial(_fused_kernel, inv_l=1.0 / L),
            out_shape=jax.ShapeDtypeStruct((N, C, L), x.dtype),
            grid=(N,),
            in_specs=[
                pl.BlockSpec((1, C, L), lambda n: (n, 0, 0)),
                pl.BlockSpec((Cr, C), lambda n: (0, 0)),
                pl.BlockSpec((Cr, 1), lambda n: (0, 0)),
                pl.BlockSpec((C, Cr), lambda n: (0, 0)),
                pl.BlockSpec((C, 1), lambda n: (0, 0)),
            ],
            out_specs=pl.BlockSpec((1, C, L), lambda n: (n, 0, 0)),
            compiler_params=pltpu.CompilerParams(
                dimension_semantics=("parallel",),
                vmem_limit_bytes=int(min(limit_cap, max(8 << 20, fused_need)))),
            cost_estimate=pl.CostEstimate(
                flops=2 * N * C * L + 4 * N * C * Cr,
                transcendentals=N * C,
                bytes_accessed=2 * N * C * L * itemsize + param_bytes),
        )(x, w1f, b1c, w2f, b2c)

    # ---------------- two-phase streaming path (large samples) ----------------
    # Pad L to a multiple of 128: zero padding does not change the pooled sum
    # (inv_l uses the true L) and keeps phase-2 stores lane-dense.
    Lp = ((L + _CHUNK - 1) // _CHUNK) * _CHUNK
    xp = x if Lp == L else jnp.pad(x, ((0, 0), (0, 0), (0, Lp - L)))

    if l_tile is None:
        l_tile = _pick_l_tile(Lp, C, itemsize, per_buffer)
    assert Lp % l_tile == 0 and l_tile % _CHUNK == 0
    n_l = Lp // l_tile

    # Phase 1: mean over L -> pooled (N, C, 1) f32.
    pool_footprint = 2 * C * l_tile * itemsize + 2 * C * 4 + C * _CHUNK * 4
    pooled = pl.pallas_call(
        functools.partial(_pool_kernel, inv_l=1.0 / L),
        out_shape=jax.ShapeDtypeStruct((N, C, 1), jnp.float32),
        grid=(N, n_l),
        in_specs=[pl.BlockSpec((1, C, l_tile), lambda n, l: (n, 0, l))],
        out_specs=pl.BlockSpec((1, C, 1), lambda n, l: (n, 0, 0)),
        scratch_shapes=[pltpu.VMEM((C, _CHUNK), jnp.float32)],
        compiler_params=pltpu.CompilerParams(
            dimension_semantics=("parallel", "arbitrary"),
            vmem_limit_bytes=int(min(limit_cap, max(8 << 20, 2 * pool_footprint)))),
        cost_estimate=pl.CostEstimate(
            flops=N * C * Lp,
            transcendentals=0,
            bytes_accessed=N * C * Lp * itemsize + N * C * 4),
    )(xp)

    # Tiny excitation MLP batched over N in plain XLA (<<1% MXU; hoisted out of
    # the kernel so phase 1 carries no weight buffers in VMEM).
    p = pooled[:, :, 0]                                           # (N, C) f32
    h = jnp.maximum(p @ w1f.T + b1.astype(jnp.float32), 0.0)      # (N, Cr)
    gate = jax.nn.sigmoid(h @ w2f.T + b2.astype(jnp.float32))     # (N, C)
    gate = gate[:, :, None]                                       # (N, C, 1) f32

    # Phase 2: out = x * gate, lane-dense streaming, both axes megacore-parallel.
    scale_footprint = 4 * C * l_tile * itemsize + 2 * C * 4
    out = pl.pallas_call(
        _scale_kernel,
        out_shape=jax.ShapeDtypeStruct((N, C, Lp), x.dtype),
        grid=(N, n_l),
        in_specs=[
            pl.BlockSpec((1, C, l_tile), lambda n, l: (n, 0, l)),
            pl.BlockSpec((1, C, 1), lambda n, l: (n, 0, 0)),
        ],
        out_specs=pl.BlockSpec((1, C, l_tile), lambda n, l: (n, 0, l)),
        compiler_params=pltpu.CompilerParams(
            dimension_semantics=("parallel", "parallel"),
            vmem_limit_bytes=int(min(limit_cap, max(8 << 20, 2 * scale_footprint)))),
        cost_estimate=pl.CostEstimate(
            flops=N * C * Lp,
            transcendentals=0,
            bytes_accessed=2 * N * C * Lp * itemsize + N * C * 4),
    )(xp, gate)
    return out if Lp == L else out[:, :, :L]


# ------------------------------ pure-JAX reference ---------------------------

def se_block_ref(x, w1, b1, w2, b2):
    pooled = jnp.mean(x, axis=-1)                           # (N, C)
    h = jnp.maximum(pooled @ w1.T + b1, 0.0)                # (N, Cr)
    g = jax.nn.sigmoid(h @ w2.T + b2)                       # (N, C)
    return x * g[:, :, None]


if __name__ == "__main__":
    N, C, reduction = 2, 32, 8
    Cr = C // reduction

    key = jax.random.PRNGKey(0)
    kx, k1, kb1, k2, kb2, kx2 = jax.random.split(key, 6)

    # PyTorch nn.Linear layout: weight (out, in), bias (out,).
    lim1 = 1.0 / (C ** 0.5)
    w1 = jax.random.uniform(k1, (Cr, C), minval=-lim1, maxval=lim1, dtype=jnp.float32)
    b1 = jax.random.uniform(kb1, (Cr,), minval=-lim1, maxval=lim1, dtype=jnp.float32)
    lim2 = 1.0 / (Cr ** 0.5)
    w2 = jax.random.uniform(k2, (C, Cr), minval=-lim2, maxval=lim2, dtype=jnp.float32)
    b2 = jax.random.uniform(kb2, (C,), minval=-lim2, maxval=lim2, dtype=jnp.float32)

    # Case 1: lane-dense L, auto path (fused single-pass at this size).
    L = 1024
    x = jax.random.normal(kx, (N, C, L), dtype=jnp.float32)
    ref = se_block_ref(x, w1, b1, w2, b2)
    out = jax.block_until_ready(se_block(x, w1, b1, w2, b2))
    assert out.shape == (N, C, L)
    assert jnp.allclose(out, ref, atol=1e-5, rtol=1e-5), "case 1 (fused) mismatch"

    # Case 2: force the two-phase streaming path with multi-tile accumulation.
    out2 = jax.block_until_ready(se_block(x, w1, b1, w2, b2, fused=False, l_tile=256))
    assert jnp.allclose(out2, ref, atol=1e-5, rtol=1e-5), "case 2 (two-phase) mismatch"

    # Case 3: small, non-128-multiple L on the fused path (full-L block).
    L3 = 48
    x3 = jax.random.normal(kx2, (N, C, L3), dtype=jnp.float32)
    ref3 = se_block_ref(x3, w1, b1, w2, b2)
    out3 = jax.block_until_ready(se_block(x3, w1, b1, w2, b2))
    assert jnp.allclose(out3, ref3, atol=1e-5, rtol=1e-5), "case 3 (fused, ragged L) mismatch"

    # Case 4: non-128-multiple L forced through the padded two-phase path.
    out4 = jax.block_until_ready(se_block(x3, w1, b1, w2, b2, fused=False))
    assert jnp.allclose(out4, ref3, atol=1e-5, rtol=1e-5), "case 4 (padded two-phase) mismatch"

    print("KERNEL_OK")
</pallas_src>

<mosaic_0001>
module attributes {stable_mosaic.version = 11 : i64} {
  func.func @_fused_kernel(%arg0: i32, %arg1: memref<1x32x1024xf32, #tpu.memory_space<vmem>>, %arg2: memref<4x32xf32, #tpu.memory_space<vmem>>, %arg3: memref<4x1xf32, #tpu.memory_space<vmem>>, %arg4: memref<32x4xf32, #tpu.memory_space<vmem>>, %arg5: memref<32x1xf32, #tpu.memory_space<vmem>>, %arg6: memref<1x32x1024xf32, #tpu.memory_space<vmem>>) attributes {dimension_semantics = [#tpu.dimension_semantics<parallel>], iteration_bounds = array<i64: 2>, scalar_prefetch = 0 : i64, scratch_operands = 0 : i64, tpu.core_type = #tpu.core_type<tc>, window_params = [{transform_indices = @transform_0, window_bounds = array<i64: 1, 32, 1024>}, {pipeline_mode = #tpu.pipeline_mode<synchronous>, transform_indices = @transform_1, window_bounds = array<i64: 4, 32>}, {pipeline_mode = #tpu.pipeline_mode<synchronous>, transform_indices = @transform_2, window_bounds = array<i64: 4, 1>}, {pipeline_mode = #tpu.pipeline_mode<synchronous>, transform_indices = @transform_3, window_bounds = array<i64: 32, 4>}, {pipeline_mode = #tpu.pipeline_mode<synchronous>, transform_indices = @transform_4, window_bounds = array<i64: 32, 1>}, {transform_indices = @transform_5, window_bounds = array<i64: 1, 32, 1024>}]} {
    %c0 = arith.constant 0 : index
    %c0_0 = arith.constant 0 : index
    %c0_1 = arith.constant 0 : index
    %0 = vector.load %arg1[%c0, %c0_0, %c0_1] : memref<1x32x1024xf32, #tpu.memory_space<vmem>>, vector<1x32x128xf32>
    %1 = vector.shape_cast %0 : vector<1x32x128xf32> to vector<32x128xf32>
    %c0_2 = arith.constant 0 : index
    %c0_3 = arith.constant 0 : index
    %c128 = arith.constant 128 : index
    %2 = vector.load %arg1[%c0_2, %c0_3, %c128] : memref<1x32x1024xf32, #tpu.memory_space<vmem>>, vector<1x32x128xf32>
    %3 = vector.shape_cast %2 : vector<1x32x128xf32> to vector<32x128xf32>
    %4 = arith.addf %1, %3 : vector<32x128xf32>
    %c0_4 = arith.constant 0 : index
    %c0_5 = arith.constant 0 : index
    %c256 = arith.constant 256 : index
    %5 = vector.load %arg1[%c0_4, %c0_5, %c256] : memref<1x32x1024xf32, #tpu.memory_space<vmem>>, vector<1x32x128xf32>
    %6 = vector.shape_cast %5 : vector<1x32x128xf32> to vector<32x128xf32>
    %7 = arith.addf %4, %6 : vector<32x128xf32>
    %c0_6 = arith.constant 0 : index
    %c0_7 = arith.constant 0 : index
    %c384 = arith.constant 384 : index
    %8 = vector.load %arg1[%c0_6, %c0_7, %c384] : memref<1x32x1024xf32, #tpu.memory_space<vmem>>, vector<1x32x128xf32>
    %9 = vector.shape_cast %8 : vector<1x32x128xf32> to vector<32x128xf32>
    %10 = arith.addf %7, %9 : vector<32x128xf32>
    %c0_8 = arith.constant 0 : index
    %c0_9 = arith.constant 0 : index
    %c512 = arith.constant 512 : index
    %11 = vector.load %arg1[%c0_8, %c0_9, %c512] : memref<1x32x1024xf32, #tpu.memory_space<vmem>>, vector<1x32x128xf32>
    %12 = vector.shape_cast %11 : vector<1x32x128xf32> to vector<32x128xf32>
    %13 = arith.addf %10, %12 : vector<32x128xf32>
    %c0_10 = arith.constant 0 : index
    %c0_11 = arith.constant 0 : index
    %c640 = arith.constant 640 : index
    %14 = vector.load %arg1[%c0_10, %c0_11, %c640] : memref<1x32x1024xf32, #tpu.memory_space<vmem>>, vector<1x32x128xf32>
    %15 = vector.shape_cast %14 : vector<1x32x128xf32> to vector<32x128xf32>
    %16 = arith.addf %13, %15 : vector<32x128xf32>
    %c0_12 = arith.constant 0 : index
    %c0_13 = arith.constant 0 : index
    %c768 = arith.constant 768 : index
    %17 = vector.load %arg1[%c0_12, %c0_13, %c768] : memref<1x32x1024xf32, #tpu.memory_space<vmem>>, vector<1x32x128xf32>
    %18 = vector.shape_cast %17 : vector<1x32x128xf32> to vector<32x128xf32>
    %19 = arith.addf %16, %18 : vector<32x128xf32>
    %c0_14 = arith.constant 0 : index
    %c0_15 = arith.constant 0 : index
    %c896 = arith.constant 896 : index
    %20 = vector.load %arg1[%c0_14, %c0_15, %c896] : memref<1x32x1024xf32, #tpu.memory_space<vmem>>, vector<1x32x128xf32>
    %21 = vector.shape_cast %20 : vector<1x32x128xf32> to vector<32x128xf32>
    %22 = arith.addf %19, %21 : vector<32x128xf32>
    %cst = arith.constant dense<0.000000e+00> : vector<32xf32>
    %23 = vector.multi_reduction <add>, %22, %cst [1] : vector<32x128xf32> to vector<32xf32>
    %24 = vector.shape_cast %23 : vector<32xf32> to vector<32x1xf32>
    %cst_16 = arith.constant 9.765625E-4 : f32
    %25 = vector.broadcast %cst_16 : f32 to vector<32x1xf32>
    %26 = arith.mulf %24, %25 : vector<32x1xf32>
    %c0_17 = arith.constant 0 : index
    %c0_18 = arith.constant 0 : index
    %27 = vector.load %arg2[%c0_17, %c0_18] : memref<4x32xf32, #tpu.memory_space<vmem>>, vector<4x32xf32>
    %cst_19 = arith.constant dense<0.000000e+00> : vector<4x1xf32>
    %28 = tpu.matmul %27, %26, %cst_19 {dimension_numbers = #tpu.dot_dimension_numbers<[1], [0], [0], [1], [0, 0, 1, 1], [], []>} : vector<4x32xf32>, vector<32x1xf32>, vector<4x1xf32> -> vector<4x1xf32>
    %c0_20 = arith.constant 0 : index
    %c0_21 = arith.constant 0 : index
    %29 = vector.load %arg3[%c0_20, %c0_21] : memref<4x1xf32, #tpu.memory_space<vmem>>, vector<4x1xf32>
    %30 = arith.addf %28, %29 : vector<4x1xf32>
    %cst_22 = arith.constant 0.000000e+00 : f32
    %31 = vector.broadcast %cst_22 : f32 to vector<4x1xf32>
    %32 = arith.maximumf %30, %31 : vector<4x1xf32>
    %c0_23 = arith.constant 0 : index
    %c0_24 = arith.constant 0 : index
    %33 = vector.load %arg4[%c0_23, %c0_24] : memref<32x4xf32, #tpu.memory_space<vmem>>, vector<32x4xf32>
    %cst_25 = arith.constant dense<0.000000e+00> : vector<32x1xf32>
    %34 = tpu.matmul %33, %32, %cst_25 {dimension_numbers = #tpu.dot_dimension_numbers<[1], [0], [0], [1], [0, 0, 1, 1], [], []>} : vector<32x4xf32>, vector<4x1xf32>, vector<32x1xf32> -> vector<32x1xf32>
    %c0_26 = arith.constant 0 : index
    %c0_27 = arith.constant 0 : index
    %35 = vector.load %arg5[%c0_26, %c0_27] : memref<32x1xf32, #tpu.memory_space<vmem>>, vector<32x1xf32>
    %36 = arith.addf %34, %35 : vector<32x1xf32>
    %37 = arith.negf %36 : vector<32x1xf32>
    %38 = math.exp %37 : vector<32x1xf32>
    %cst_28 = arith.constant 1.000000e+00 : f32
    %39 = vector.broadcast %cst_28 : f32 to vector<32x1xf32>
    %40 = arith.addf %39, %38 : vector<32x1xf32>
    %41 = arith.divf %39, %40 : vector<32x1xf32>
    %c0_29 = arith.constant 0 : index
    %c0_30 = arith.constant 0 : index
    %c0_31 = arith.constant 0 : index
    %42 = vector.load %arg1[%c0_29, %c0_30, %c0_31] : memref<1x32x1024xf32, #tpu.memory_space<vmem>>, vector<1x32x1024xf32>
    %43 = vector.shape_cast %42 : vector<1x32x1024xf32> to vector<32x1024xf32>
    %44 = vector.broadcast %41 : vector<32x1xf32> to vector<32x1024xf32>
    %45 = arith.mulf %43, %44 : vector<32x1024xf32>
    %c0_32 = arith.constant 0 : index
    %c0_33 = arith.constant 0 : index
    %c0_34 = arith.constant 0 : index
    %46 = vector.load %arg6[%c0_32, %c0_33, %c0_34] : memref<1x32x1024xf32, #tpu.memory_space<vmem>>, vector<1x32x1024xf32>
    %47 = vector.shape_cast %46 : vector<1x32x1024xf32> to vector<32x1024xf32>
    %48 = vector.shape_cast %45 : vector<32x1024xf32> to vector<1x32x1024xf32>
    tpu.vector_store %arg6[%c0_32, %c0_33, %c0_34], %48 {strides = array<i32>} : memref<1x32x1024xf32, #tpu.memory_space<vmem>>, vector<1x32x1024xf32>,
    return
  }
  func.func @transform_0(%arg0: i32) -> (i32, i32, i32) {
    %c0_i32 = arith.constant 0 : i32
    %c0_i32_0 = arith.constant 0 : i32
    %c0_i32_1 = arith.constant 0 : i32
    return %arg0, %c0_i32, %c0_i32_0 : i32, i32, i32
  }
  func.func @transform_1(%arg0: i32) -> (i32, i32) {
    %c0_i32 = arith.constant 0 : i32
    %c0_i32_0 = arith.constant 0 : i32
    %c0_i32_1 = arith.constant 0 : i32
    return %c0_i32, %c0_i32_0 : i32, i32
  }
  func.func @transform_2(%arg0: i32) -> (i32, i32) {
    %c0_i32 = arith.constant 0 : i32
    %c0_i32_0 = arith.constant 0 : i32
    %c0_i32_1 = arith.constant 0 : i32
    return %c0_i32, %c0_i32_0 : i32, i32
  }
  func.func @transform_3(%arg0: i32) -> (i32, i32) {
    %c0_i32 = arith.constant 0 : i32
    %c0_i32_0 = arith.constant 0 : i32
    %c0_i32_1 = arith.constant 0 : i32
    return %c0_i32, %c0_i32_0 : i32, i32
  }
  func.func @transform_4(%arg0: i32) -> (i32, i32) {
    %c0_i32 = arith.constant 0 : i32
    %c0_i32_0 = arith.constant 0 : i32
    %c0_i32_1 = arith.constant 0 : i32
    return %c0_i32, %c0_i32_0 : i32, i32
  }
  func.func @transform_5(%arg0: i32) -> (i32, i32, i32) {
    %c0_i32 = arith.constant 0 : i32
    %c0_i32_0 = arith.constant 0 : i32
    %c0_i32_1 = arith.constant 0 : i32
    return %arg0, %c0_i32, %c0_i32_0 : i32, i32, i32
  }
}

</mosaic_0001>

<llo_original>
// kernel: tpu_custom_call.1
$region0: #{tpu_custom_call.1}
  #allocation0 [shape = 'u32[]', space=smem, size = 0x4, offset = 0x4, fixed_abs, tag = 'smem constant byte address 0x4 - core index']
  #allocation1 [shape = 'u32[144,128]{1,0:T(1,128)}', space=vmem, size = 0x12000, scoped, tag = 'internal scratch']
  %s0 = inlined_call_operand.hbm [shape: f32[2,32,1024], index: 0, kind: input, shape index: {}]
  %s1 = inlined_call_operand.vmem [shape: f32[4,32], index: 1, kind: input, shape index: {}]
  %s2 = inlined_call_operand.vmem [shape: f32[4,1], index: 2, kind: input, shape index: {}]
  %s3 = inlined_call_operand.vmem [shape: f32[32,4], index: 3, kind: input, shape index: {}]
  %s4 = inlined_call_operand.vmem [shape: f32[32,1], index: 4, kind: input, shape index: {}]
  %s5 = inlined_call_operand.hbm [shape: f32[2,32,1024], index: 5, kind: output, shape index: {}]
  %s6 = sld [smem:[#allocation0]]
  $region57: #{tpu_custom_call.1} parent=0
    _
  %s8 = ssub.s32 1, %s6
  %s9 = scalar_select 0, %s8, %s6
  $region1: #{tpu_custom_call.1} parent=0
    #allocation2 [shape = 'u8[262144]{0}', space=vmem, size = 0x40000, scoped, tag = 'input window, operand 0']
    #allocation3 [shape = 's32[2]{0}', space=sflag, size = 0x8, scoped, tag = 'scoped memory for tpu_custom_call.1']
    #allocation4 [shape = 's32[2]{0}', space=sflag, size = 0x8, scoped, tag = 'scoped memory for tpu_custom_call.1']
    #allocation5 [shape = 'u8[262144]{0}', space=vmem, size = 0x40000, scoped, tag = 'output window, operand 0']
    %10 = vsyncpa [#allocation3], 0
    %s11 = scalar_lea.sflag [#allocation3], 1
    %12 = vsyncpa %s11, 0
    %13 = vsyncpa [#allocation4], 0
    %s14 = scalar_lea.sflag [#allocation4], 1
    %15 = vsyncpa %s14, 0
    loop: start=0, step=1, limit=4
    $region2: #{tpu_custom_call.1} parent=1 // loop_pre_header
      _
    $region3: #{tpu_custom_call.1} parent=1 // loop_header
      %s17 = sphi 0, %s21
      %p18 = scmp.ge.s32.totalorder %s17, 4
      %s27 = sphi 0, %s29
      %s30 = sphi 0, %s27
      %s31 = sphi 0, %s30
      %s47 = sphi 0, %s31
      %s51 = sphi 0, %s51
      %s53 = sphi 0, %s51
      %s54 = sphi 0, %s53
      %s68 = sphi 0, %s54
      %s72 = sphi 0, %s72
      %s74 = sphi 0, %s72
      %s75 = sphi 0, %s74
      %s89 = sphi 0, %s75
      %s93 = sphi 0, %s93
      %s95 = sphi 0, %s93
      %s96 = sphi 0, %s95
      %s110 = sphi 0, %s96
      %s114 = sphi 0, %s114
      %s116 = sphi 0, %s114
      %s117 = sphi 0, %s116
      %s131 = sphi 0, %s117
      %s137 = sphi 0, %s139
      %s140 = sphi 0, %s137
      %s141 = sphi 0, %s140
      %s157 = sphi 0, %s141
    $region4: #{tpu_custom_call.1} parent=1 // loop_header_branch
      %20 = sbr.rel (%p18) target = $region8
    $region5: #{tpu_custom_call.1} parent=1 // loop_body
      %s22 = ssub.s32 %s17, 1
      %s23 = ssub.s32 %s17, 2
      %s24 = sadd.s32 %s17, 1
      %s25 = ssub.s32 %s17, %s24
      %p26 = scmp.eq.s32.totalorder %s25, 0
      %s28 = sadd.s32 %s27, 1
      %s29 = scalar_select %p26, %s27, %s28
      %p32 = pneg %p26
      %p33 = scmp.eq.s32.totalorder %s17, 1
      %p34 = por %p32, %p33
      %p35 = scmp.ne.s32.totalorder %s27, %s30
      %p36 = scmp.eq.s32.totalorder %s17, 0
      %p37 = por %p35, %p36
      %p38 = scmp.ne.s32.totalorder %s27, %s30
      %p39 = scmp.eq.s32.totalorder %s22, 1
      %p40 = por %p38, %p39
      %p41 = scmp.ne.s32.totalorder %s30, %s31
      %p42 = scmp.eq.s32.totalorder %s22, 0
      %p43 = por %p41, %p42
      %p44 = scmp.ne.s32.totalorder %s30, %s31
      %p45 = scmp.eq.s32.totalorder %s23, 1
      %p46 = por %p44, %p45
      %p48 = scmp.ne.s32.totalorder %s31, %s47
      %p49 = scmp.eq.s32.totalorder %s23, 0
      %p50 = por %p48, %p49
      %s52 = sadd.s32 %s51, 1
      %p55 = scmp.eq.s32.totalorder %s17, 1
      %p56 = scmp.ne.s32.totalorder %s51, %s53
      %p57 = scmp.eq.s32.totalorder %s17, 0
      %p58 = por %p56, %p57
      %p59 = scmp.ne.s32.totalorder %s51, %s53
      %p60 = scmp.eq.s32.totalorder %s22, 1
      %p61 = por %p59, %p60
      %p62 = scmp.ne.s32.totalorder %s53, %s54
      %p63 = scmp.eq.s32.totalorder %s22, 0
      %p64 = por %p62, %p63
      %p65 = scmp.ne.s32.totalorder %s53, %s54
      %p66 = scmp.eq.s32.totalorder %s23, 1
      %p67 = por %p65, %p66
      %p69 = scmp.ne.s32.totalorder %s54, %s68
      %p70 = scmp.eq.s32.totalorder %s23, 0
      %p71 = por %p69, %p70
      %s73 = sadd.s32 %s72, 1
      %p76 = scmp.eq.s32.totalorder %s17, 1
      %p77 = scmp.ne.s32.totalorder %s72, %s74
      %p78 = scmp.eq.s32.totalorder %s17, 0
      %p79 = por %p77, %p78
      %p80 = scmp.ne.s32.totalorder %s72, %s74
      %p81 = scmp.eq.s32.totalorder %s22, 1
      %p82 = por %p80, %p81
      %p83 = scmp.ne.s32.totalorder %s74, %s75
      %p84 = scmp.eq.s32.totalorder %s22, 0
      %p85 = por %p83, %p84
      %p86 = scmp.ne.s32.totalorder %s74, %s75
      %p87 = scmp.eq.s32.totalorder %s23, 1
      %p88 = por %p86, %p87
      %p90 = scmp.ne.s32.totalorder %s75, %s89
      %p91 = scmp.eq.s32.totalorder %s23, 0
      %p92 = por %p90, %p91
      %s94 = sadd.s32 %s93, 1
      %p97 = scmp.eq.s32.totalorder %s17, 1
      %p98 = scmp.ne.s32.totalorder %s93, %s95
      %p99 = scmp.eq.s32.totalorder %s17, 0
      %p100 = por %p98, %p99
      %p101 = scmp.ne.s32.totalorder %s93, %s95
      %p102 = scmp.eq.s32.totalorder %s22, 1
      %p103 = por %p101, %p102
      %p104 = scmp.ne.s32.totalorder %s95, %s96
      %p105 = scmp.eq.s32.totalorder %s22, 0
      %p106 = por %p104, %p105
      %p107 = scmp.ne.s32.totalorder %s95, %s96
      %p108 = scmp.eq.s32.totalorder %s23, 1
      %p109 = por %p107, %p108
      %p111 = scmp.ne.s32.totalorder %s96, %s110
      %p112 = scmp.eq.s32.totalorder %s23, 0
      %p113 = por %p111, %p112
      %s115 = sadd.s32 %s114, 1
      %p118 = scmp.eq.s32.totalorder %s17, 1
      %p119 = scmp.ne.s32.totalorder %s114, %s116
      %p120 = scmp.eq.s32.totalorder %s17, 0
      %p121 = por %p119, %p120
      %p122 = scmp.ne.s32.totalorder %s114, %s116
      %p123 = scmp.eq.s32.totalorder %s22, 1
      %p124 = por %p122, %p123
      %p125 = scmp.ne.s32.totalorder %s116, %s117
      %p126 = scmp.eq.s32.totalorder %s22, 0
      %p127 = por %p125, %p126
      %p128 = scmp.ne.s32.totalorder %s116, %s117
      %p129 = scmp.eq.s32.totalorder %s23, 1
      %p130 = por %p128, %p129
      %p132 = scmp.ne.s32.totalorder %s117, %s131
      %p133 = scmp.eq.s32.totalorder %s23, 0
      %p134 = por %p132, %p133
      %s135 = ssub.s32 %s17, %s24
      %p136 = scmp.eq.s32.totalorder %s135, 0
      %s138 = sadd.s32 %s137, 1
      %s139 = scalar_select %p136, %s137, %s138
      %p142 = pneg %p136
      %p143 = scmp.eq.s32.totalorder %s17, 1
      %p144 = por %p142, %p143
      %p145 = scmp.ne.s32.totalorder %s137, %s140
      %p146 = scmp.eq.s32.totalorder %s17, 0
      %p147 = por %p145, %p146
      %p148 = scmp.ne.s32.totalorder %s137, %s140
      %p149 = scmp.eq.s32.totalorder %s22, 1
      %p150 = por %p148, %p149
      %p151 = scmp.ne.s32.totalorder %s140, %s141
      %p152 = scmp.eq.s32.totalorder %s22, 0
      %p153 = por %p151, %p152
      %p154 = scmp.ne.s32.totalorder %s140, %s141
      %p155 = scmp.eq.s32.totalorder %s23, 1
      %p156 = por %p154, %p155
      %p158 = scmp.ne.s32.totalorder %s141, %s157
      %p159 = scmp.eq.s32.totalorder %s23, 0
      %p160 = por %p158, %p159
      %p161 = scmp.le.s32.totalorder 1, %s17
      %p162 = scmp.lt.s32.totalorder %s17, 3
      %p163 = pnand %p161, %p162
      %p164 = pneg %p163
      // Predicated region
      $region9: #{tpu_custom_call.1} parent=5 // pred_check
        _
      $region10: #{tpu_custom_call.1} parent=5 // pred_check_branch
        %166 = sbr.rel (%p163) target = $region12
      $region11: #{tpu_custom_call.1} parent=5 // pred_region
        %s167 = ssub.s32 %s17, 1
        // Predicated region
        $region13: #{tpu_custom_call.1} parent=11 // pred_check
          %p168 = pneg %p64
        $region14: #{tpu_custom_call.1} parent=11 // pred_check_branch
          %170 = sbr.rel (%p168) target = $region16
        $region15: #{tpu_custom_call.1} parent=11 // pred_region
          _
        $region16: #{tpu_custom_call.1} parent=11 // pred_fallthru
          _
        // Predicated region
        $region17: #{tpu_custom_call.1} parent=11 // pred_check
          %p171 = pneg %p85
        $region18: #{tpu_custom_call.1} parent=11 // pred_check_branch
          %173 = sbr.rel (%p171) target = $region20
        $region19: #{tpu_custom_call.1} parent=11 // pred_region
          _
        $region20: #{tpu_custom_call.1} parent=11 // pred_fallthru
          _
        // Predicated region
        $region21: #{tpu_custom_call.1} parent=11 // pred_check
          %p174 = pneg %p106
        $region22: #{tpu_custom_call.1} parent=11 // pred_check_branch
          %176 = sbr.rel (%p174) target = $region24
        $region23: #{tpu_custom_call.1} parent=11 // pred_region
          _
        $region24: #{tpu_custom_call.1} parent=11 // pred_fallthru
          _
        // Predicated region
        $region25: #{tpu_custom_call.1} parent=11 // pred_check
          %p177 = pneg %p127
        $region26: #{tpu_custom_call.1} parent=11 // pred_check_branch
          %179 = sbr.rel (%p177) target = $region28
        $region27: #{tpu_custom_call.1} parent=11 // pred_region
          _
        $region28: #{tpu_custom_call.1} parent=11 // pred_fallthru
          _
      $region12: #{tpu_custom_call.1} parent=5 // pred_fallthru
        _
      %p180 = scmp.lt.s32.totalorder %s17, 2
      // Predicated region
      $region29: #{tpu_custom_call.1} parent=5 // pred_check
        %p181 = pneg %p180
      $region30: #{tpu_custom_call.1} parent=5 // pred_check_branch
        %183 = sbr.rel (%p181) target = $region32
      $region31: #{tpu_custom_call.1} parent=5 // pred_region
        // Predicated region
        $region33: #{tpu_custom_call.1} parent=31 // pred_check
          %p184 = pneg %p37
        $region34: #{tpu_custom_call.1} parent=31 // pred_check_branch
          %186 = sbr.rel (%p184) target = $region36
        $region35: #{tpu_custom_call.1} parent=31 // pred_region
          %s187 = sand.u32 %s27, 1
          %s188 = scalar_lea.sflag [#allocation3], %s187
          %s189 = sand.u32 %s27, 1
          %s190 = smul.addr %s189, 256
          %s191 = scalar_lea.vmem [#allocation2], %s190
          %s193 = ssub.s32 4096, 4096
          %194 = vsyncadd %s188, %s193
          %s195 = smul.addr %s17, 32
          %s196 = smul.addr %s195, 128
          %s197 = scalar_lea.hbm %s0, %s196
          %s198 = sshll.u32 %s191, 4
          %s199 = int_to_ptr.vmem [resolvable:$true] %s198
          %204 = dma.hbm_to_vmem [thread:$0]  %s197, 4096, %s199, %s188, 1024, 1024, 64
        $region36: #{tpu_custom_call.1} parent=31 // pred_fallthru
          _
      $region32: #{tpu_custom_call.1} parent=5 // pred_fallthru
        _
      %p205 = scmp.le.s32.totalorder 1, %s17
      %p206 = scmp.lt.s32.totalorder %s17, 3
      %p207 = pnand %p205, %p206
      %p208 = pneg %p207
      // Predicated region
      $region37: #{tpu_custom_call.1} parent=5 // pred_check
        _
      $region38: #{tpu_custom_call.1} parent=5 // pred_check_branch
        %210 = sbr.rel (%p207) target = $region40
      $region39: #{tpu_custom_call.1} parent=5 // pred_region
        %s211 = ssub.s32 %s17, 1
        %s212 = sand.u32 %s30, 1
        %s213 = scalar_lea.sflag [#allocation3], %s212
        %s214 = sand.u32 %s30, 1
        %s215 = smul.addr %s214, 256
        %s216 = scalar_lea.vmem [#allocation2], %s215
        // Predicated region
        $region41: #{tpu_custom_call.1} parent=39 // pred_check
          %p217 = pneg %p43
        $region42: #{tpu_custom_call.1} parent=39 // pred_check_branch
          %219 = sbr.rel (%p217) target = $region44
        $region43: #{tpu_custom_call.1} parent=39 // pred_region
          %220 = dma.done %s213, 4096
        $region44: #{tpu_custom_call.1} parent=39 // pred_fallthru
          _
        %s221 = sand.u32 %s30, 1
        %s222 = scalar_lea.sflag [#allocation3], %s221
        %s223 = sand.u32 %s30, 1
        %s224 = smul.addr %s223, 256
        %s225 = scalar_lea.vmem [#allocation2], %s224
        %p226 = pneg %p43
        %p227 = pneg %p40
        %p228 = pneg %p64
        %p229 = pneg %p61
        %p230 = pneg %p85
        %p231 = pneg %p82
        %p232 = pneg %p106
        %p233 = pneg %p103
        %p234 = pneg %p127
        %p235 = pneg %p124
        %p236 = pneg %p153
        %p237 = pneg %p150
        %s238 = sand.u32 %s140, 1
        %s239 = scalar_lea.sflag [#allocation4], %s238
        %s240 = sand.u32 %s140, 1
        %s241 = smul.addr %s240, 256
        %s242 = scalar_lea.vmem [#allocation5], %s241
        %v243 = vld [vmem:[%s216] sm:$0xff]
        %v244 = vld [vmem:[%s216 + $0x40] sm:$0xff]
        %v245 = vld [vmem:[%s216 + $0x80] sm:$0xff]
        %v246 = vld [vmem:[%s216 + $0xc0] sm:$0xff]
        %v247 = vld [vmem:[%s216 + $0x8] sm:$0xff]
        %v248 = vld [vmem:[%s216 + $0x48] sm:$0xff]
        %v249 = vld [vmem:[%s216 + $0x88] sm:$0xff]
        %v250 = vld [vmem:[%s216 + $0xc8] sm:$0xff]
        %v251 = vadd.f32 %v243, %v247
        %v252 = vadd.f32 %v244, %v248
        %v253 = vadd.f32 %v245, %v249
        %v254 = vadd.f32 %v246, %v250
        %v255 = vld [vmem:[%s216 + $0x10] sm:$0xff]
        %v256 = vld [vmem:[%s216 + $0x50] sm:$0xff]
        %v257 = vld [vmem:[%s216 + $0x90] sm:$0xff]
        %v258 = vld [vmem:[%s216 + $0xd0] sm:$0xff]
        %v259 = vadd.f32 %v251, %v255
        %v260 = vadd.f32 %v252, %v256
        %v261 = vadd.f32 %v253, %v257
        %v262 = vadd.f32 %v254, %v258
        %v263 = vld [vmem:[%s216 + $0x18] sm:$0xff]
        %v264 = vld [vmem:[%s216 + $0x58] sm:$0xff]
        %v265 = vld [vmem:[%s216 + $0x98] sm:$0xff]
        %v266 = vld [vmem:[%s216 + $0xd8] sm:$0xff]
        %v267 = vadd.f32 %v259, %v263
        %v268 = vadd.f32 %v260, %v264
        %v269 = vadd.f32 %v261, %v265
        %v270 = vadd.f32 %v262, %v266
        %v271 = vld [vmem:[%s216 + $0x20] sm:$0xff]
        %v272 = vld [vmem:[%s216 + $0x60] sm:$0xff]
        %v273 = vld [vmem:[%s216 + $0xa0] sm:$0xff]
        %v274 = vld [vmem:[%s216 + $0xe0] sm:$0xff]
        %v275 = vadd.f32 %v267, %v271
        %v276 = vadd.f32 %v268, %v272
        %v277 = vadd.f32 %v269, %v273
        %v278 = vadd.f32 %v270, %v274
        %v279 = vld [vmem:[%s216 + $0x28] sm:$0xff]
        %v280 = vld [vmem:[%s216 + $0x68] sm:$0xff]
        %v281 = vld [vmem:[%s216 + $0xa8] sm:$0xff]
        %v282 = vld [vmem:[%s216 + $0xe8] sm:$0xff]
        %v283 = vadd.f32 %v275, %v279
        %v284 = vadd.f32 %v276, %v280
        %v285 = vadd.f32 %v277, %v281
        %v286 = vadd.f32 %v278, %v282
        %v287 = vld [vmem:[%s216 + $0x30] sm:$0xff]
        %v288 = vld [vmem:[%s216 + $0x70] sm:$0xff]
        %v289 = vld [vmem:[%s216 + $0xb0] sm:$0xff]
        %v290 = vld [vmem:[%s216 + $0xf0] sm:$0xff]
        %v291 = vadd.f32 %v283, %v287
        %v292 = vadd.f32 %v284, %v288
        %v293 = vadd.f32 %v285, %v289
        %v294 = vadd.f32 %v286, %v290
        %v295 = vld [vmem:[%s216 + $0x38] sm:$0xff]
        %v296 = vld [vmem:[%s216 + $0x78] sm:$0xff]
        %v297 = vld [vmem:[%s216 + $0xb8] sm:$0xff]
        %v298 = vld [vmem:[%s216 + $0xf8] sm:$0xff]
        %v299 = vadd.f32 %v291, %v295
        %v300 = vadd.f32 %v292, %v296
        %v301 = vadd.f32 %v293, %v297
        %v302 = vadd.f32 %v294, %v298
        %303 = vadd.xlane.f32.xlu0 %v299
        %v304 = vpop.xlane.xlu0 %303
        %305 = vadd.xlane.f32.xlu0 %v300
        %v306 = vpop.xlane.xlu0 %305
        %307 = vadd.xlane.f32.xlu0 %v301
        %v308 = vpop.xlane.xlu0 %307
        %309 = vadd.xlane.f32.xlu0 %v302
        %v310 = vpop.xlane.xlu0 %309
        %v311 = vmul.f32 %v304, 0.0009765625
        %v312 = vmul.f32 %v306, 0.0009765625
        %v313 = vmul.f32 %v308, 0.0009765625
        %v314 = vmul.f32 %v310, 0.0009765625
        %v315 = vld [vmem:[%s1] sm:$0xf]
        %v316 = vld [vmem:[%s2] sm:$0xf]
        %vm317 = vcmask 261120
        %v319 = vsel %vm317, %v315, 0
        %321 = vmatprep.subr.mxu0 0.0
        %322 = vmatpush1.msra.mxu0 0.0
        %323 = vmatprep.subr.mxu0 0.0
        %324 = vmatpush1.msra.mxu0 0.0
        %325 = vmatprep.subr.mxu0 0.0
        %326 = vmatpush1.msra.mxu0 0.0
        %327 = vmatprep.subr.mxu0 0.0
        %328 = vmatpush1.msra.mxu0 0.0
        %329 = vmatprep.subr.mxu0 0.0
        %330 = vmatpush1.msra.mxu0 0.0
        %331 = vmatprep.subr.mxu0 0.0
        %332 = vmatpush1.msra.mxu0 0.0
        %333 = vmatprep.subr.mxu0 0.0
        %334 = vmatpush1.msra.mxu0 0.0
        %335 = vmatprep.subr.mxu0 0.0
        %336 = vmatpush1.msra.mxu0 0.0
        %337 = vmatprep.subr.mxu0 0.0
        %338 = vmatpush1.msra.mxu0 0.0
        %339 = vmatprep.subr.mxu0 0.0
        %340 = vmatpush1.msra.mxu0 0.0
        %341 = vmatprep.subr.mxu0 0.0
        %342 = vmatpush1.msra.mxu0 0.0
        %343 = vmatprep.subr.mxu0 0.0
        %344 = vmatpush1.msra.mxu0 0.0
        %345 = vmatprep.subr.mxu0 0.0
        %346 = vmatpush1.msra.mxu0 %v314
        %347 = vmatprep.subr.mxu0 0.0
        %348 = vmatpush1.msra.mxu0 %v313
        %349 = vmatprep.subr.mxu0 0.0
        %350 = vmatpush1.msra.mxu0 %v312
        %351 = vmatprep.subr.mxu0 0.0
        %352 = vmatpush1.msra.mxu0 %v311
        %353 = vmatprep.subr.mxu0 0.0
        %354 = vmatpush2.msra.mxu0 0.0
        %355 = vmatprep.subr.mxu0 0.0
        %356 = vmatpush2.msra.mxu0 0.0
        %357 = vmatprep.subr.mxu0 0.0
        %358 = vmatpush2.msra.mxu0 0.0
        %359 = vmatprep.subr.mxu0 0.0
        %360 = vmatpush2.msra.mxu0 0.0
        %361 = vmatprep.subr.mxu0 0.0
        %362 = vmatpush2.msra.mxu0 0.0
        %363 = vmatprep.subr.mxu0 0.0
        %364 = vmatpush2.msra.mxu0 0.0
        %365 = vmatprep.subr.mxu0 0.0
        %366 = vmatpush2.msra.mxu0 0.0
        %367 = vmatprep.subr.mxu0 0.0
        %368 = vmatpush2.msra.mxu0 0.0
        %369 = vmatprep.subr.mxu0 0.0
        %370 = vmatpush2.msra.mxu0 0.0
        %371 = vmatprep.subr.mxu0 0.0
        %372 = vmatpush2.msra.mxu0 0.0
        %373 = vmatprep.subr.mxu0 0.0
        %374 = vmatpush2.msra.mxu0 0.0
        %375 = vmatprep.subr.mxu0 0.0
        %376 = vmatpush2.msra.mxu0 0.0
        %377 = vmatprep.subr.mxu0 0.0
        %378 = vmatpush2.msra.mxu0 0.0
        %379 = vmatprep.subr.mxu0 0.0
        %380 = vmatpush2.msra.mxu0 0.0
        %381 = vmatprep.subr.mxu0 0.0
        %382 = vmatpush2.msra.mxu0 0.0
        %383 = vmatprep.subr.mxu0 0.0
        %384 = vmatpush2.msra.mxu0 0.0
        %385 = vmatprep.mubr.f32.mxu0 0.0
        %386 = vmatmul.mubr.f32.gmra.mxu0 %v319
        %v387 = vpop.f32.mrf.mxu0
        %v388 = vadd.f32 %v316, %v387
        %v389 = vpop.f32.mrf.mxu0
        %390 = vdwg.mxu0
        %v391 = vmax.f32 %v388, 0.0
        %v392 = vld [vmem:[%s3] sm:$0xff]
        %v393 = vld [vmem:[%s3 + $0x8] sm:$0xff]
        %v394 = vld [vmem:[%s3 + $0x10] sm:$0xff]
        %v395 = vld [vmem:[%s3 + $0x18] sm:$0xff]
        %v396 = vld [vmem:[%s4] sm:$0xff]
        %v397 = vld [vmem:[%s4 + $0x8] sm:$0xff]
        %v398 = vld [vmem:[%s4 + $0x10] sm:$0xff]
        %v399 = vld [vmem:[%s4 + $0x18] sm:$0xff]
        %vm400 = vcmask 31744
        %v402 = vsel %vm400, %v392, 0
        %v405 = vsel %vm400, %v393, 0
        %v408 = vsel %vm400, %v394, 0
        %v411 = vsel %vm400, %v395, 0
        %vm413 = vcmask 1043456
        %v415 = vsel %vm413, %v391, 0
        %417 = vmatprep.subr.mxu0 0.0
        %418 = vmatpush1.msra.mxu0 0.0
        %419 = vmatprep.subr.mxu0 0.0
        %420 = vmatpush1.msra.mxu0 0.0
        %421 = vmatprep.subr.mxu0 0.0
        %422 = vmatpush1.msra.mxu0 0.0
        %423 = vmatprep.subr.mxu0 0.0
        %424 = vmatpush1.msra.mxu0 0.0
        %425 = vmatprep.subr.mxu0 0.0
        %426 = vmatpush1.msra.mxu0 0.0
        %427 = vmatprep.subr.mxu0 0.0
        %428 = vmatpush1.msra.mxu0 0.0
        %429 = vmatprep.subr.mxu0 0.0
        %430 = vmatpush1.msra.mxu0 0.0
        %431 = vmatprep.subr.mxu0 0.0
        %432 = vmatpush1.msra.mxu0 0.0
        %433 = vmatprep.subr.mxu0 0.0
        %434 = vmatpush1.msra.mxu0 0.0
        %435 = vmatprep.subr.mxu0 0.0
        %436 = vmatpush1.msra.mxu0 0.0
        %437 = vmatprep.subr.mxu0 0.0
        %438 = vmatpush1.msra.mxu0 0.0
        %439 = vmatprep.subr.mxu0 0.0
        %440 = vmatpush1.msra.mxu0 0.0
        %441 = vmatprep.subr.mxu0 0.0
        %442 = vmatpush1.msra.mxu0 0.0
        %443 = vmatprep.subr.mxu0 0.0
        %444 = vmatpush1.msra.mxu0 0.0
        %445 = vmatprep.subr.mxu0 0.0
        %446 = vmatpush1.msra.mxu0 0.0
        %447 = vmatprep.subr.mxu0 0.0
        %448 = vmatpush1.msra.mxu0 %v415
        %449 = vmatprep.subr.mxu0 0.0
        %450 = vmatpush2.msra.mxu0 0.0
        %451 = vmatprep.subr.mxu0 0.0
        %452 = vmatpush2.msra.mxu0 0.0
        %453 = vmatprep.subr.mxu0 0.0
        %454 = vmatpush2.msra.mxu0 0.0
        %455 = vmatprep.subr.mxu0 0.0
        %456 = vmatpush2.msra.mxu0 0.0
        %457 = vmatprep.subr.mxu0 0.0
        %458 = vmatpush2.msra.mxu0 0.0
        %459 = vmatprep.subr.mxu0 0.0
        %460 = vmatpush2.msra.mxu0 0.0
        %461 = vmatprep.subr.mxu0 0.0
        %462 = vmatpush2.msra.mxu0 0.0
        %463 = vmatprep.subr.mxu0 0.0
        %464 = vmatpush2.msra.mxu0 0.0
        %465 = vmatprep.subr.mxu0 0.0
        %466 = vmatpush2.msra.mxu0 0.0
        %467 = vmatprep.subr.mxu0 0.0
        %468 = vmatpush2.msra.mxu0 0.0
        %469 = vmatprep.subr.mxu0 0.0
        %470 = vmatpush2.msra.mxu0 0.0
        %471 = vmatprep.subr.mxu0 0.0
        %472 = vmatpush2.msra.mxu0 0.0
        %473 = vmatprep.subr.mxu0 0.0
        %474 = vmatpush2.msra.mxu0 0.0
        %475 = vmatprep.subr.mxu0 0.0
        %476 = vmatpush2.msra.mxu0 0.0
        %477 = vmatprep.subr.mxu0 0.0
        %478 = vmatpush2.msra.mxu0 0.0
        %479 = vmatprep.subr.mxu0 0.0
        %480 = vmatpush2.msra.mxu0 0.0
        %481 = vmatprep.mubr.f32.mxu0 0.0
        %482 = vmatmul.mubr.f32.gmra.mxu0 %v402
        %v483 = vpop.f32.mrf.mxu0
        %v484 = vadd.f32 %v396, %v483
        %v485 = vpop.f32.mrf.mxu0
        %486 = vmatprep.mubr.f32.mxu0 0.0
        %487 = vmatmul.mubr.f32.gmra.mxu0 %v405
        %v488 = vpop.f32.mrf.mxu0
        %v489 = vadd.f32 %v397, %v488
        %v490 = vpop.f32.mrf.mxu0
        %491 = vmatprep.mubr.f32.mxu0 0.0
        %492 = vmatmul.mubr.f32.gmra.mxu0 %v408
        %v493 = vpop.f32.mrf.mxu0
        %v494 = vadd.f32 %v398, %v493
        %v495 = vpop.f32.mrf.mxu0
        %496 = vmatprep.mubr.f32.mxu0 0.0
        %497 = vmatmul.mubr.f32.gmra.mxu0 %v411
        %v498 = vpop.f32.mrf.mxu0
        %v499 = vadd.f32 %v399, %v498
        %v500 = vpop.f32.mrf.mxu0
        %501 = vdwg.mxu0
        %v502 = vxor.u32 %v484, 2147483648
        %v503 = vxor.u32 %v489, 2147483648
        %v504 = vxor.u32 %v494, 2147483648
        %v505 = vxor.u32 %v499, 2147483648
        %v506 = vmul.f32 %v502, 1.442695
        %v507 = vpow.pop %v506
        %v508 = vmul.f32 %v503, 1.442695
        %v509 = vpow.pop %v508
        %v510 = vmul.f32 %v504, 1.442695
        %v511 = vpow.pop %v510
        %v512 = vmul.f32 %v505, 1.442695
        %v513 = vpow.pop %v512
        %v514 = vadd.f32 %v507, 1.0
        %v515 = vadd.f32 %v509, 1.0
        %v516 = vadd.f32 %v511, 1.0
        %v517 = vadd.f32 %v513, 1.0
        %v518 = vrcp.pop %v514
        %v519 = vmul.f32 1.0, %v518
        %v520 = vrcp.pop %v515
        %v521 = vmul.f32 1.0, %v520
        %v522 = vrcp.pop %v516
        %v523 = vmul.f32 1.0, %v522
        %v524 = vrcp.pop %v517
        %v525 = vmul.f32 1.0, %v524
        %v526 = vld [vmem:[%s216] sm:$0xff]
        %v527 = vld [vmem:[%s216 + $0x8] sm:$0xff]
        %v528 = vld [vmem:[%s216 + $0x10] sm:$0xff]
        %v529 = vld [vmem:[%s216 + $0x18] sm:$0xff]
        %v530 = vld [vmem:[%s216 + $0x20] sm:$0xff]
        %v531 = vld [vmem:[%s216 + $0x28] sm:$0xff]
        %v532 = vld [vmem:[%s216 + $0x30] sm:$0xff]
        %v533 = vld [vmem:[%s216 + $0x40] sm:$0xff]
        %v534 = vld [vmem:[%s216 + $0x48] sm:$0xff]
        %v535 = vld [vmem:[%s216 + $0x50] sm:$0xff]
        %v536 = vld [vmem:[%s216 + $0x58] sm:$0xff]
        %v537 = vld [vmem:[%s216 + $0x60] sm:$0xff]
        %v538 = vld [vmem:[%s216 + $0x68] sm:$0xff]
        %v539 = vld [vmem:[%s216 + $0x70] sm:$0xff]
        %v540 = vld [vmem:[%s216 + $0x80] sm:$0xff]
        %v541 = vld [vmem:[%s216 + $0x88] sm:$0xff]
        %v542 = vld [vmem:[%s216 + $0x90] sm:$0xff]
        %v543 = vld [vmem:[%s216 + $0x98] sm:$0xff]
        %v544 = vld [vmem:[%s216 + $0xa0] sm:$0xff]
        %v545 = vld [vmem:[%s216 + $0xa8] sm:$0xff]
        %v546 = vld [vmem:[%s216 + $0xb0] sm:$0xff]
        %v547 = vld [vmem:[%s216 + $0xc0] sm:$0xff]
        %v548 = vld [vmem:[%s216 + $0xc8] sm:$0xff]
        %v549 = vld [vmem:[%s216 + $0xd0] sm:$0xff]
        %v550 = vld [vmem:[%s216 + $0xd8] sm:$0xff]
        %v551 = vld [vmem:[%s216 + $0xe0] sm:$0xff]
        %v552 = vld [vmem:[%s216 + $0xe8] sm:$0xff]
        %v553 = vld [vmem:[%s216 + $0xf0] sm:$0xff]
        %555 = vset.pattern.permute.xlu0 0
        %556 = vperm.xlu0 %555, %v519
        %v557 = vpop.permute.xlu0 %556
        %560 = vset.pattern.permute.xlu0 0
        %561 = vperm.xlu0 %560, %v521
        %v562 = vpop.permute.xlu0 %561
        %565 = vset.pattern.permute.xlu0 0
        %566 = vperm.xlu0 %565, %v523
        %v567 = vpop.permute.xlu0 %566
        %570 = vset.pattern.permute.xlu0 0
        %571 = vperm.xlu0 %570, %v525
        %v572 = vpop.permute.xlu0 %571
        %v574 = vmul.f32 %v526, %v557
        %v575 = vmul.f32 %v527, %v557
        %v576 = vmul.f32 %v528, %v557
        %v577 = vmul.f32 %v529, %v557
        %v578 = vmul.f32 %v530, %v557
        %v579 = vmul.f32 %v531, %v557
        %v580 = vmul.f32 %v532, %v557
        %v581 = vmul.f32 %v295, %v557
        %v582 = vmul.f32 %v533, %v562
        %v583 = vmul.f32 %v534, %v562
        %v584 = vmul.f32 %v535, %v562
        %v585 = vmul.f32 %v536, %v562
        %v586 = vmul.f32 %v537, %v562
        %v587 = vmul.f32 %v538, %v562
        %v588 = vmul.f32 %v539, %v562
        %v589 = vmul.f32 %v296, %v562
        %v590 = vmul.f32 %v540, %v567
        %v591 = vmul.f32 %v541, %v567
        %v592 = vmul.f32 %v542, %v567
        %v593 = vmul.f32 %v543, %v567
        %v594 = vmul.f32 %v544, %v567
        %v595 = vmul.f32 %v545, %v567
        %v596 = vmul.f32 %v546, %v567
        %v597 = vmul.f32 %v297, %v567
        %v598 = vmul.f32 %v547, %v572
        %v599 = vmul.f32 %v548, %v572
        %v600 = vmul.f32 %v549, %v572
        %v601 = vmul.f32 %v550, %v572
        %v602 = vmul.f32 %v551, %v572
        %v603 = vmul.f32 %v552, %v572
        %v604 = vmul.f32 %v553, %v572
        %v605 = vmul.f32 %v298, %v572
        %606 = vst [vmem:[%s242] sm:$0xff] %v574
        %607 = vst [vmem:[%s242 + $0x8] sm:$0xff] %v575
        %608 = vst [vmem:[%s242 + $0x10] sm:$0xff] %v576
        %609 = vst [vmem:[%s242 + $0x18] sm:$0xff] %v577
        %610 = vst [vmem:[%s242 + $0x20] sm:$0xff] %v578
        %611 = vst [vmem:[%s242 + $0x28] sm:$0xff] %v579
        %612 = vst [vmem:[%s242 + $0x30] sm:$0xff] %v580
        %613 = vst [vmem:[%s242 + $0x38] sm:$0xff] %v581
        %614 = vst [vmem:[%s242 + $0x40] sm:$0xff] %v582
        %615 = vst [vmem:[%s242 + $0x48] sm:$0xff] %v583
        %616 = vst [vmem:[%s242 + $0x50] sm:$0xff] %v584
        %617 = vst [vmem:[%s242 + $0x58] sm:$0xff] %v585
        %618 = vst [vmem:[%s242 + $0x60] sm:$0xff] %v586
        %619 = vst [vmem:[%s242 + $0x68] sm:$0xff] %v587
        %620 = vst [vmem:[%s242 + $0x70] sm:$0xff] %v588
        %621 = vst [vmem:[%s242 + $0x78] sm:$0xff] %v589
        %622 = vst [vmem:[%s242 + $0x80] sm:$0xff] %v590
        %623 = vst [vmem:[%s242 + $0x88] sm:$0xff] %v591
        %624 = vst [vmem:[%s242 + $0x90] sm:$0xff] %v592
        %625 = vst [vmem:[%s242 + $0x98] sm:$0xff] %v593
        %626 = vst [vmem:[%s242 + $0xa0] sm:$0xff] %v594
        %627 = vst [vmem:[%s242 + $0xa8] sm:$0xff] %v595
        %628 = vst [vmem:[%s242 + $0xb0] sm:$0xff] %v596
        %629 = vst [vmem:[%s242 + $0xb8] sm:$0xff] %v597
        %630 = vst [vmem:[%s242 + $0xc0] sm:$0xff] %v598
        %631 = vst [vmem:[%s242 + $0xc8] sm:$0xff] %v599
        %632 = vst [vmem:[%s242 + $0xd0] sm:$0xff] %v600
        %633 = vst [vmem:[%s242 + $0xd8] sm:$0xff] %v601
        %634 = vst [vmem:[%s242 + $0xe0] sm:$0xff] %v602
        %635 = vst [vmem:[%s242 + $0xe8] sm:$0xff] %v603
        %636 = vst [vmem:[%s242 + $0xf0] sm:$0xff] %v604
        %637 = vst [vmem:[%s242 + $0xf8] sm:$0xff] %v605
        %s638 = sand.u32 %s140, 1
        %s639 = scalar_lea.sflag [#allocation4], %s638
        %s640 = sand.u32 %s140, 1
        %s641 = smul.addr %s640, 256
        %s642 = scalar_lea.vmem [#allocation5], %s641
        // Predicated region
        $region45: #{tpu_custom_call.1} parent=39 // pred_check
          %p643 = pneg %p150
        $region46: #{tpu_custom_call.1} parent=39 // pred_check_branch
          %645 = sbr.rel (%p643) target = $region48
        $region47: #{tpu_custom_call.1} parent=39 // pred_region
          %s647 = ssub.s32 4096, 4096
          %648 = vsyncadd %s639, %s647
          %s649 = smul.addr %s22, 32
          %s650 = smul.addr %s649, 128
          %s651 = scalar_lea.hbm %s5, %s650
          %s652 = sshll.u32 %s642, 4
          %s653 = int_to_ptr.vmem [resolvable:$true] %s652
          %658 = dma.vmem_to_hbm [thread:$0]  %s653, 4096, %s651, %s639, 1024, 1024, 64
        $region48: #{tpu_custom_call.1} parent=39 // pred_fallthru
          _
      $region40: #{tpu_custom_call.1} parent=5 // pred_fallthru
        _
      %p659 = scmp.le.s32.totalorder 2, %s17
      // Predicated region
      $region49: #{tpu_custom_call.1} parent=5 // pred_check
        %p660 = pneg %p659
      $region50: #{tpu_custom_call.1} parent=5 // pred_check_branch
        %662 = sbr.rel (%p660) target = $region52
      $region51: #{tpu_custom_call.1} parent=5 // pred_region
        %s663 = ssub.s32 %s17, 2
        // Predicated region
        $region53: #{tpu_custom_call.1} parent=51 // pred_check
          %p664 = pneg %p156
        $region54: #{tpu_custom_call.1} parent=51 // pred_check_branch
          %666 = sbr.rel (%p664) target = $region56
        $region55: #{tpu_custom_call.1} parent=51 // pred_region
          %s667 = sand.u32 %s141, 1
          %s668 = scalar_lea.sflag [#allocation4], %s667
          %s669 = sand.u32 %s141, 1
          %s670 = smul.addr %s669, 256
          %s671 = scalar_lea.vmem [#allocation5], %s670
          %672 = dma.done %s668, 4096
        $region56: #{tpu_custom_call.1} parent=51 // pred_fallthru
          _
      $region52: #{tpu_custom_call.1} parent=5 // pred_fallthru
        _
    $region6: #{tpu_custom_call.1} parent=1 // loop_footer
      %s21 = sadd.s32 1, %s17
    $region7: #{tpu_custom_call.1} parent=1 // loop_footer_branch
      %16 = sbr.rel target = $region3
    $region8: #{tpu_custom_call.1} parent=1 // loop_exit
      _
    %673 = vsyncpa [#allocation3], 1
    %s674 = scalar_lea.sflag [#allocation3], 1
    %675 = vsyncpa %s674, 1
    %676 = vsyncpa [#allocation4], 1
    %s677 = scalar_lea.sflag [#allocation4], 1
    %678 = vsyncpa %s677, 1

</llo_original>
